<compile_context>
chip_gen: v5e
topology: v5e:2x2
jax: 0.10.0
libtpu: 0.0.40
codegen_flags: <defaults>
</compile_context>

<pallas_src>
import jax
import jax.numpy as jnp
from jax.experimental import pallas as pl
from jax.experimental.pallas import tpu as pltpu


def _mlp_kernel(x_ref, w1_ref, b1_ref, w2_ref, b2_ref, w3_ref, b3_ref, o_ref):
    # x_ref: (TB, 25) natural layout.  Transpose in VMEM -> (25, TB): features on
    # sublanes, batch on lanes (MXU N side).
    xt = x_ref[...].T                                     # (25, TB) f32
    cdt = w1_ref.dtype                                    # matmul compute dtype (bf16 or f32)

    # fc1 + relu -> (64, TB)
    h1 = jnp.dot(w1_ref[...], xt.astype(cdt),
                 preferred_element_type=jnp.float32) + b1_ref[...]
    h1 = jnp.maximum(h1, 0.0)

    # fc2 + relu -> (32, TB)
    h2 = jnp.dot(w2_ref[...], h1.astype(cdt),
                 preferred_element_type=jnp.float32) + b2_ref[...]
    h2 = jnp.maximum(h2, 0.0)

    # fc3 (no activation) -> (15, TB); transpose back to natural (TB, 15) layout.
    out = jnp.dot(w3_ref[...], h2.astype(cdt),
                  preferred_element_type=jnp.float32) + b3_ref[...]
    o_ref[...] = out.T.astype(o_ref.dtype)


def come_solo_net(x, params, tb=8192, use_bf16=True):
    """Forward pass of ComeSoloNet.

    x: (B, 25) float32.  params: (w1, b1, w2, b2, w3, b3) with w_i of shape
    (out, in) and b_i of shape (out, 1) (PyTorch orientation).
    """
    w1, b1, w2, b2, w3, b3 = params
    B = x.shape[0]

    if use_bf16:  # matmul operands in bf16, accumulate in f32
        w1, w2, w3 = (w.astype(jnp.bfloat16) for w in (w1, w2, w3))

    # Batch tile: multiple of 128 lanes, capped at 16384 (v7x-safe VMEM budget),
    # and small enough that batches with >=2 lane-groups give >=2 grid steps.
    n128 = pl.cdiv(B, 128)
    tb = min(tb, 16384)
    tb = max(128, min(tb, ((n128 + 1) // 2) * 128))
    Bp = pl.cdiv(B, tb) * tb
    grid = (Bp // tb,)

    # Only materialize a padded copy when the batch is actually ragged.
    x_in = x if Bp == B else jnp.pad(x, ((0, Bp - B), (0, 0)))

    resident = lambda a: pl.BlockSpec(a.shape, lambda i: (0, 0))

    wbytes = 2 if use_bf16 else 4
    flops = 2 * Bp * (25 * 64 + 64 * 32 + 32 * 15)
    bytes_accessed = (4 * Bp * (25 + 15)
                      + wbytes * (25 * 64 + 64 * 32 + 32 * 15)
                      + 4 * (64 + 32 + 15))

    out = pl.pallas_call(
        _mlp_kernel,
        out_shape=jax.ShapeDtypeStruct((Bp, 15), jnp.float32),
        grid=grid,
        in_specs=[
            pl.BlockSpec((tb, 25), lambda i: (i, 0)),   # x tile (pipelined)
            resident(w1), resident(b1),                 # weights/biases: DMA'd once
            resident(w2), resident(b2),
            resident(w3), resident(b3),
        ],
        out_specs=pl.BlockSpec((tb, 15), lambda i: (i, 0)),
        compiler_params=pltpu.CompilerParams(
            dimension_semantics=("parallel",),          # megacore shard on v7x
            vmem_limit_bytes=32 * 1024 * 1024,
        ),
        cost_estimate=pl.CostEstimate(
            flops=flops, transcendentals=0, bytes_accessed=bytes_accessed),
    )(x_in, w1, b1, w2, b2, w3, b3)

    return out if Bp == B else out[:B]


def init_params(key):
    """Deterministic init matching nn.Linear; weights as (out, in), biases (out, 1)."""
    k1, k2, k3, k4, k5, k6 = jax.random.split(key, 6)

    def uniform_linear(kw, kb, fan_in, fan_out):
        # PyTorch default: U(-1/sqrt(fan_in), 1/sqrt(fan_in)) for both W and b.
        bound = 1.0 / jnp.sqrt(jnp.float32(fan_in))
        w = jax.random.uniform(kw, (fan_out, fan_in), jnp.float32, -bound, bound)
        b = jax.random.uniform(kb, (fan_out, 1), jnp.float32, -bound, bound)
        return w, b

    w1, b1 = uniform_linear(k1, k2, 25, 64)
    w2, b2 = uniform_linear(k3, k4, 64, 32)
    w3, b3 = uniform_linear(k5, k6, 32, 15)
    return (w1, b1, w2, b2, w3, b3)


def _reference(x, params):
    w1, b1, w2, b2, w3, b3 = params
    h1 = jnp.maximum(x @ w1.T + b1.T, 0.0)
    h2 = jnp.maximum(h1 @ w2.T + b2.T, 0.0)
    return h2 @ w3.T + b3.T


if __name__ == "__main__":
    key = jax.random.PRNGKey(0)
    k_params, k_x = jax.random.split(key)
    params = init_params(k_params)

    B = 8
    x = jax.random.normal(k_x, (B, 25), jnp.float32)
    ref = _reference(x, params)

    # bf16-matmul fast path (default).
    out = jax.block_until_ready(come_solo_net(x, params))
    assert out.shape == (B, 15), out.shape
    assert jnp.allclose(out, ref, atol=5e-2, rtol=5e-2), "mismatch (bf16 path)"

    # Strict f32 path.
    out_f32 = jax.block_until_ready(come_solo_net(x, params, use_bf16=False))
    assert jnp.allclose(out_f32, ref, atol=1e-4, rtol=1e-4), "mismatch (f32 path)"

    # Ragged, multi-tile batch to validate grid / tail-padding path.
    B2 = 300
    x2 = jax.random.normal(jax.random.PRNGKey(1), (B2, 25), jnp.float32)
    out2 = jax.block_until_ready(come_solo_net(x2, params, tb=128))
    assert out2.shape == (B2, 15)
    assert jnp.allclose(out2, _reference(x2, params), atol=5e-2, rtol=5e-2)

    print("KERNEL_OK")
</pallas_src>

<mosaic_0001>
module attributes {stable_mosaic.version = 11 : i64} {
  func.func @_mlp_kernel(%arg0: i32, %arg1: memref<128x25xf32, #tpu.memory_space<vmem>>, %arg2: memref<64x25xbf16, #tpu.memory_space<vmem>>, %arg3: memref<64x1xf32, #tpu.memory_space<vmem>>, %arg4: memref<32x64xbf16, #tpu.memory_space<vmem>>, %arg5: memref<32x1xf32, #tpu.memory_space<vmem>>, %arg6: memref<15x32xbf16, #tpu.memory_space<vmem>>, %arg7: memref<15x1xf32, #tpu.memory_space<vmem>>, %arg8: memref<128x15xf32, #tpu.memory_space<vmem>>) attributes {dimension_semantics = [#tpu.dimension_semantics<parallel>], iteration_bounds = array<i64: 1>, scalar_prefetch = 0 : i64, scratch_operands = 0 : i64, tpu.core_type = #tpu.core_type<tc>, window_params = [{transform_indices = @transform_0, window_bounds = array<i64: 128, 25>}, {pipeline_mode = #tpu.pipeline_mode<synchronous>, transform_indices = @transform_1, window_bounds = array<i64: 64, 25>}, {pipeline_mode = #tpu.pipeline_mode<synchronous>, transform_indices = @transform_2, window_bounds = array<i64: 64, 1>}, {pipeline_mode = #tpu.pipeline_mode<synchronous>, transform_indices = @transform_3, window_bounds = array<i64: 32, 64>}, {pipeline_mode = #tpu.pipeline_mode<synchronous>, transform_indices = @transform_4, window_bounds = array<i64: 32, 1>}, {pipeline_mode = #tpu.pipeline_mode<synchronous>, transform_indices = @transform_5, window_bounds = array<i64: 15, 32>}, {pipeline_mode = #tpu.pipeline_mode<synchronous>, transform_indices = @transform_6, window_bounds = array<i64: 15, 1>}, {transform_indices = @transform_7, window_bounds = array<i64: 128, 15>}]} {
    %c0 = arith.constant 0 : index
    %c0_0 = arith.constant 0 : index
    %0 = vector.load %arg1[%c0, %c0_0] : memref<128x25xf32, #tpu.memory_space<vmem>>, vector<128x25xf32>
    %1 = tpu.transpose %0, [1, 0] : vector<128x25xf32> -> vector<25x128xf32>
    %c0_1 = arith.constant 0 : index
    %c0_2 = arith.constant 0 : index
    %2 = vector.load %arg2[%c0_1, %c0_2] : memref<64x25xbf16, #tpu.memory_space<vmem>>, vector<64x25xbf16>
    %3 = arith.truncf %1 : vector<25x128xf32> to vector<25x128xbf16>
    %cst = arith.constant dense<0.000000e+00> : vector<64x128xf32>
    %4 = tpu.matmul %2, %3, %cst {dimension_numbers = #tpu.dot_dimension_numbers<[1], [0], [0], [1], [0, 0, 1, 1], [], []>} : vector<64x25xbf16>, vector<25x128xbf16>, vector<64x128xf32> -> vector<64x128xf32>
    %c0_3 = arith.constant 0 : index
    %c0_4 = arith.constant 0 : index
    %5 = vector.load %arg3[%c0_3, %c0_4] : memref<64x1xf32, #tpu.memory_space<vmem>>, vector<64x1xf32>
    %6 = vector.broadcast %5 : vector<64x1xf32> to vector<64x128xf32>
    %7 = arith.addf %4, %6 : vector<64x128xf32>
    %cst_5 = arith.constant 0.000000e+00 : f32
    %8 = vector.broadcast %cst_5 : f32 to vector<64x128xf32>
    %9 = arith.maximumf %7, %8 : vector<64x128xf32>
    %c0_6 = arith.constant 0 : index
    %c0_7 = arith.constant 0 : index
    %10 = vector.load %arg4[%c0_6, %c0_7] : memref<32x64xbf16, #tpu.memory_space<vmem>>, vector<32x64xbf16>
    %11 = arith.truncf %9 : vector<64x128xf32> to vector<64x128xbf16>
    %cst_8 = arith.constant dense<0.000000e+00> : vector<32x128xf32>
    %12 = tpu.matmul %10, %11, %cst_8 {dimension_numbers = #tpu.dot_dimension_numbers<[1], [0], [0], [1], [0, 0, 1, 1], [], []>} : vector<32x64xbf16>, vector<64x128xbf16>, vector<32x128xf32> -> vector<32x128xf32>
    %c0_9 = arith.constant 0 : index
    %c0_10 = arith.constant 0 : index
    %13 = vector.load %arg5[%c0_9, %c0_10] : memref<32x1xf32, #tpu.memory_space<vmem>>, vector<32x1xf32>
    %14 = vector.broadcast %13 : vector<32x1xf32> to vector<32x128xf32>
    %15 = arith.addf %12, %14 : vector<32x128xf32>
    %cst_11 = arith.constant 0.000000e+00 : f32
    %16 = vector.broadcast %cst_11 : f32 to vector<32x128xf32>
    %17 = arith.maximumf %15, %16 : vector<32x128xf32>
    %c0_12 = arith.constant 0 : index
    %c0_13 = arith.constant 0 : index
    %18 = vector.load %arg6[%c0_12, %c0_13] : memref<15x32xbf16, #tpu.memory_space<vmem>>, vector<15x32xbf16>
    %19 = arith.truncf %17 : vector<32x128xf32> to vector<32x128xbf16>
    %cst_14 = arith.constant dense<0.000000e+00> : vector<15x128xf32>
    %20 = tpu.matmul %18, %19, %cst_14 {dimension_numbers = #tpu.dot_dimension_numbers<[1], [0], [0], [1], [0, 0, 1, 1], [], []>} : vector<15x32xbf16>, vector<32x128xbf16>, vector<15x128xf32> -> vector<15x128xf32>
    %c0_15 = arith.constant 0 : index
    %c0_16 = arith.constant 0 : index
    %21 = vector.load %arg7[%c0_15, %c0_16] : memref<15x1xf32, #tpu.memory_space<vmem>>, vector<15x1xf32>
    %22 = vector.broadcast %21 : vector<15x1xf32> to vector<15x128xf32>
    %23 = arith.addf %20, %22 : vector<15x128xf32>
    %24 = tpu.transpose %23, [1, 0] : vector<15x128xf32> -> vector<128x15xf32>
    %c0_17 = arith.constant 0 : index
    %c0_18 = arith.constant 0 : index
    %25 = vector.load %arg8[%c0_17, %c0_18] : memref<128x15xf32, #tpu.memory_space<vmem>>, vector<128x15xf32>
    tpu.vector_store %arg8[%c0_17, %c0_18], %24 {strides = array<i32>} : memref<128x15xf32, #tpu.memory_space<vmem>>, vector<128x15xf32>,
    return
  }
  func.func @transform_0(%arg0: i32) -> (i32, i32) {
    %c0_i32 = arith.constant 0 : i32
    %c0_i32_0 = arith.constant 0 : i32
    return %arg0, %c0_i32 : i32, i32
  }
  func.func @transform_1(%arg0: i32) -> (i32, i32) {
    %c0_i32 = arith.constant 0 : i32
    %c0_i32_0 = arith.constant 0 : i32
    %c0_i32_1 = arith.constant 0 : i32
    return %c0_i32, %c0_i32_0 : i32, i32
  }
  func.func @transform_2(%arg0: i32) -> (i32, i32) {
    %c0_i32 = arith.constant 0 : i32
    %c0_i32_0 = arith.constant 0 : i32
    %c0_i32_1 = arith.constant 0 : i32
    return %c0_i32, %c0_i32_0 : i32, i32
  }
  func.func @transform_3(%arg0: i32) -> (i32, i32) {
    %c0_i32 = arith.constant 0 : i32
    %c0_i32_0 = arith.constant 0 : i32
    %c0_i32_1 = arith.constant 0 : i32
    return %c0_i32, %c0_i32_0 : i32, i32
  }
  func.func @transform_4(%arg0: i32) -> (i32, i32) {
    %c0_i32 = arith.constant 0 : i32
    %c0_i32_0 = arith.constant 0 : i32
    %c0_i32_1 = arith.constant 0 : i32
    return %c0_i32, %c0_i32_0 : i32, i32
  }
  func.func @transform_5(%arg0: i32) -> (i32, i32) {
    %c0_i32 = arith.constant 0 : i32
    %c0_i32_0 = arith.constant 0 : i32
    %c0_i32_1 = arith.constant 0 : i32
    return %c0_i32, %c0_i32_0 : i32, i32
  }
  func.func @transform_6(%arg0: i32) -> (i32, i32) {
    %c0_i32 = arith.constant 0 : i32
    %c0_i32_0 = arith.constant 0 : i32
    %c0_i32_1 = arith.constant 0 : i32
    return %c0_i32, %c0_i32_0 : i32, i32
  }
  func.func @transform_7(%arg0: i32) -> (i32, i32) {
    %c0_i32 = arith.constant 0 : i32
    %c0_i32_0 = arith.constant 0 : i32
    return %arg0, %c0_i32 : i32, i32
  }
}

</mosaic_0001>

<llo_original>
// kernel: tpu_custom_call.1
$region0: #{tpu_custom_call.1}
  #allocation0 [shape = 'u32[]', space=smem, size = 0x4, offset = 0x4, fixed_abs, tag = 'smem constant byte address 0x4 - core index']
  #allocation1 [shape = 'u32[72,128]{1,0:T(1,128)}', space=vmem, size = 0x9000, scoped, tag = 'internal scratch']
  %s0 = inlined_call_operand.vmem [shape: f32[128,25], index: 0, kind: input, shape index: {}]
  %s1 = inlined_call_operand.vmem [shape: bf16[64,25], index: 1, kind: input, shape index: {}]
  %s2 = inlined_call_operand.vmem [shape: f32[64,1], index: 2, kind: input, shape index: {}]
  %s3 = inlined_call_operand.vmem [shape: bf16[32,64], index: 3, kind: input, shape index: {}]
  %s4 = inlined_call_operand.vmem [shape: f32[32,1], index: 4, kind: input, shape index: {}]
  %s5 = inlined_call_operand.vmem [shape: bf16[15,32], index: 5, kind: input, shape index: {}]
  %s6 = inlined_call_operand.vmem [shape: f32[15,1], index: 6, kind: input, shape index: {}]
  %s7 = inlined_call_operand.vmem [shape: f32[128,15], index: 7, kind: output, shape index: {}]
  %s8 = sld [smem:[#allocation0]]
  $region38: #{tpu_custom_call.1} parent=0
    _
  %s10 = ssub.s32 1, %s8
  %s11 = scalar_select 0, %s10, %s8
  // Predicated region
  $region2: #{tpu_custom_call.1} parent=0 // pred_check
    _
  $region3: #{tpu_custom_call.1} parent=0 // pred_check_branch
    %13 = sbr.rel (0) target = $region5
  $region4: #{tpu_custom_call.1} parent=0 // pred_region
    _
  $region5: #{tpu_custom_call.1} parent=0 // pred_fallthru
    _
  // Predicated region
  $region6: #{tpu_custom_call.1} parent=0 // pred_check
    _
  $region7: #{tpu_custom_call.1} parent=0 // pred_check_branch
    %15 = sbr.rel (0) target = $region9
  $region8: #{tpu_custom_call.1} parent=0 // pred_region
    _
  $region9: #{tpu_custom_call.1} parent=0 // pred_fallthru
    _
  // Predicated region
  $region10: #{tpu_custom_call.1} parent=0 // pred_check
    _
  $region11: #{tpu_custom_call.1} parent=0 // pred_check_branch
    %17 = sbr.rel (0) target = $region13
  $region12: #{tpu_custom_call.1} parent=0 // pred_region
    _
  $region13: #{tpu_custom_call.1} parent=0 // pred_fallthru
    _
  // Predicated region
  $region14: #{tpu_custom_call.1} parent=0 // pred_check
    _
  $region15: #{tpu_custom_call.1} parent=0 // pred_check_branch
    %19 = sbr.rel (0) target = $region17
  $region16: #{tpu_custom_call.1} parent=0 // pred_region
    _
  $region17: #{tpu_custom_call.1} parent=0 // pred_fallthru
    _
  // Predicated region
  $region18: #{tpu_custom_call.1} parent=0 // pred_check
    _
  $region19: #{tpu_custom_call.1} parent=0 // pred_check_branch
    %21 = sbr.rel (0) target = $region21
  $region20: #{tpu_custom_call.1} parent=0 // pred_region
    _
  $region21: #{tpu_custom_call.1} parent=0 // pred_fallthru
    _
  // Predicated region
  $region22: #{tpu_custom_call.1} parent=0 // pred_check
    _
  $region23: #{tpu_custom_call.1} parent=0 // pred_check_branch
    %23 = sbr.rel (0) target = $region25
  $region24: #{tpu_custom_call.1} parent=0 // pred_region
    _
  $region25: #{tpu_custom_call.1} parent=0 // pred_fallthru
    _
  // Predicated region
  $region26: #{tpu_custom_call.1} parent=0 // pred_check
    _
  $region27: #{tpu_custom_call.1} parent=0 // pred_check_branch
    %25 = sbr.rel (0) target = $region29
  $region28: #{tpu_custom_call.1} parent=0 // pred_region
    _
  $region29: #{tpu_custom_call.1} parent=0 // pred_fallthru
    _
  %v27 = vld [vmem:[%s0] sm:$0xff]
  %v28 = vld [vmem:[%s0 + $0x8] sm:$0xff]
  %v29 = vld [vmem:[%s0 + $0x10] sm:$0xff]
  %v30 = vld [vmem:[%s0 + $0x18] sm:$0xff]
  %v31 = vld [vmem:[%s0 + $0x20] sm:$0xff]
  %v32 = vld [vmem:[%s0 + $0x28] sm:$0xff]
  %v33 = vld [vmem:[%s0 + $0x30] sm:$0xff]
  %v34 = vld [vmem:[%s0 + $0x38] sm:$0xff]
  %v35 = vld [vmem:[%s0 + $0x40] sm:$0xff]
  %v36 = vld [vmem:[%s0 + $0x48] sm:$0xff]
  %v37 = vld [vmem:[%s0 + $0x50] sm:$0xff]
  %v38 = vld [vmem:[%s0 + $0x58] sm:$0xff]
  %v39 = vld [vmem:[%s0 + $0x60] sm:$0xff]
  %v40 = vld [vmem:[%s0 + $0x68] sm:$0xff]
  %v41 = vld [vmem:[%s0 + $0x70] sm:$0xff]
  %v42 = vld [vmem:[%s0 + $0x78] sm:$0xff]
  %43 = vxpose.xlu0.b32.start [1/16] %v27, 128
  %44 = vxpose.xlu0.b32.cont [2/16] %v28, 128
  %45 = vxpose.xlu0.b32.cont [3/16] %v29, 128
  %46 = vxpose.xlu0.b32.cont [4/16] %v30, 128
  %47 = vxpose.xlu0.b32.cont [5/16] %v31, 128
  %48 = vxpose.xlu0.b32.cont [6/16] %v32, 128
  %49 = vxpose.xlu0.b32.cont [7/16] %v33, 128
  %50 = vxpose.xlu0.b32.cont [8/16] %v34, 128
  %51 = vxpose.xlu0.b32.cont [9/16] %v35, 128
  %52 = vxpose.xlu0.b32.cont [10/16] %v36, 128
  %53 = vxpose.xlu0.b32.cont [11/16] %v37, 128
  %54 = vxpose.xlu0.b32.cont [12/16] %v38, 128
  %55 = vxpose.xlu0.b32.cont [13/16] %v39, 128
  %56 = vxpose.xlu0.b32.cont [14/16] %v40, 128
  %57 = vxpose.xlu0.b32.cont [15/16] %v41, 128
  %58 = vxpose.xlu0.b32.end [16/16] %v42, 128
  %v59 = vpop.trf.xlu0
  %v60 = vpop.trf.xlu0
  %v61 = vpop.trf.xlu0
  %v62 = vpop.trf.xlu0
  %v63 = vpop.trf.xlu0
  %v64 = vpop.trf.xlu0
  %v65 = vpop.trf.xlu0
  %v66 = vpop.trf.xlu0
  %v67 = vpop.trf.xlu0
  %v68 = vpop.trf.xlu0
  %v69 = vpop.trf.xlu0
  %v70 = vpop.trf.xlu0
  %v71 = vpop.trf.xlu0
  %v72 = vpop.trf.xlu0
  %v73 = vpop.trf.xlu0
  %v74 = vpop.trf.xlu0
  %v75 = vld [vmem:[%s1] sm:$0xf]
  %v76 = vld [vmem:[%s1 + $0x4] sm:$0xf]
  %v77 = vld [vmem:[%s1 + $0x8] sm:$0xf]
  %v78 = vld [vmem:[%s1 + $0xc] sm:$0xf]
  %v79 = vld [vmem:[%s1 + $0x10] sm:$0xf]
  %v80 = vld [vmem:[%s1 + $0x14] sm:$0xf]
  %v81 = vld [vmem:[%s1 + $0x18] sm:$0xf]
  %v82 = vld [vmem:[%s1 + $0x1c] sm:$0xf]
  %v83 = vpack.c.bf16 %v60, %v59
  %v84 = vpack.c.bf16 %v62, %v61
  %v85 = vld [vmem:[%s2] sm:$0xff]
  %v86 = vld [vmem:[%s2 + $0x8] sm:$0xff]
  %v87 = vld [vmem:[%s2 + $0x10] sm:$0xff]
  %v88 = vld [vmem:[%s2 + $0x18] sm:$0xff]
  %v89 = vld [vmem:[%s2 + $0x20] sm:$0xff]
  %v90 = vld [vmem:[%s2 + $0x28] sm:$0xff]
  %v91 = vld [vmem:[%s2 + $0x30] sm:$0xff]
  %v92 = vld [vmem:[%s2 + $0x38] sm:$0xff]
  %94 = vset.pattern.permute.xlu0 0
  %95 = vperm.xlu0 %94, %v85
  %v96 = vpop.permute.xlu0 %95
  %99 = vset.pattern.permute.xlu0 0
  %100 = vperm.xlu0 %99, %v86
  %v101 = vpop.permute.xlu0 %100
  %104 = vset.pattern.permute.xlu0 0
  %105 = vperm.xlu0 %104, %v87
  %v106 = vpop.permute.xlu0 %105
  %109 = vset.pattern.permute.xlu0 0
  %110 = vperm.xlu0 %109, %v88
  %v111 = vpop.permute.xlu0 %110
  %114 = vset.pattern.permute.xlu0 0
  %115 = vperm.xlu0 %114, %v89
  %v116 = vpop.permute.xlu0 %115
  %119 = vset.pattern.permute.xlu0 0
  %120 = vperm.xlu0 %119, %v90
  %v121 = vpop.permute.xlu0 %120
  %124 = vset.pattern.permute.xlu0 0
  %125 = vperm.xlu0 %124, %v91
  %v126 = vpop.permute.xlu0 %125
  %129 = vset.pattern.permute.xlu0 0
  %130 = vperm.xlu0 %129, %v92
  %v131 = vpop.permute.xlu0 %130
  %v141 = vunpack.c.l.b16 %v75
  %v142 = vunpack.c.l.b16 %v76
  %v143 = vunpack.c.l.b16 %v77
  %v144 = vunpack.c.l.b16 %v78
  %v145 = vunpack.c.l.b16 %v79
  %v146 = vunpack.c.l.b16 %v80
  %v147 = vunpack.c.l.b16 %v81
  %v148 = vunpack.c.l.b16 %v82
  %v149 = vpack.c.b16 %v142, %v141
  %v150 = vpack.c.b16 %v144, %v143
  %v151 = vpack.c.b16 %v146, %v145
  %v152 = vpack.c.b16 %v148, %v147
  %vm153 = vcmask 203776
  %v155 = vsel %vm153, %v149, 0
  %v158 = vsel %vm153, %v150, 0
  %v161 = vsel %vm153, %v151, 0
  %v164 = vsel %vm153, %v152, 0
  %vm166 = vcmask 1043456
  %vm167 = vcmask 1044480
  %v168 = vsel %vm166, 4294967295, 65535
  %v169 = vsel %vm167, %v168, 0
  %v171 = vand.u32 %v84, %v169
  %173 = vmatpush.bf16.msra.mxu0 0
  %174 = vmatpush.bf16.msra.mxu0 0
  %175 = vmatpush.bf16.msra.mxu0 0
  %176 = vmatpush.bf16.msra.mxu0 0
  %177 = vmatpush.bf16.msra.mxu0 0
  %178 = vmatpush.bf16.msra.mxu0 0
  %179 = vmatpush.bf16.msra.mxu0 %v171
  %180 = vmatpush.bf16.msra.mxu0 %v83
  %181 = vmatmul.bf16.gmra.mxu0 %v155
  %v182 = vpop.f32.mrf.mxu0
  %v183 = vadd.f32 %v96, %v182
  %v184 = vpop.f32.mrf.mxu0
  %v185 = vadd.f32 %v101, %v184
  %186 = vmatmul.bf16.gmra.mxu0 %v158
  %v187 = vpop.f32.mrf.mxu0
  %v188 = vadd.f32 %v106, %v187
  %v189 = vpop.f32.mrf.mxu0
  %v190 = vadd.f32 %v111, %v189
  %191 = vmatmul.bf16.gmra.mxu0 %v161
  %v192 = vpop.f32.mrf.mxu0
  %v193 = vadd.f32 %v116, %v192
  %v194 = vpop.f32.mrf.mxu0
  %v195 = vadd.f32 %v121, %v194
  %196 = vmatmul.bf16.gmra.mxu0 %v164
  %v197 = vpop.f32.mrf.mxu0
  %v198 = vadd.f32 %v126, %v197
  %v199 = vpop.f32.mrf.mxu0
  %v200 = vadd.f32 %v131, %v199
  %201 = vdwg.mxu0
  %v202 = vmax.f32 %v183, 0.0
  %v203 = vmax.f32 %v185, 0.0
  %v204 = vmax.f32 %v188, 0.0
  %v205 = vmax.f32 %v190, 0.0
  %v206 = vmax.f32 %v193, 0.0
  %v207 = vmax.f32 %v195, 0.0
  %v208 = vmax.f32 %v198, 0.0
  %v209 = vmax.f32 %v200, 0.0
  %v210 = vld [vmem:[%s3] sm:$0xf]
  %v211 = vld [vmem:[%s3 + $0x4] sm:$0xf]
  %v212 = vld [vmem:[%s3 + $0x8] sm:$0xf]
  %v213 = vld [vmem:[%s3 + $0xc] sm:$0xf]
  %v214 = vpack.c.bf16 %v203, %v202
  %v215 = vpack.c.bf16 %v205, %v204
  %v216 = vpack.c.bf16 %v207, %v206
  %v217 = vpack.c.bf16 %v209, %v208
  %v218 = vld [vmem:[%s4] sm:$0xff]
  %v219 = vld [vmem:[%s4 + $0x8] sm:$0xff]
  %v220 = vld [vmem:[%s4 + $0x10] sm:$0xff]
  %v221 = vld [vmem:[%s4 + $0x18] sm:$0xff]
  %223 = vset.pattern.permute.xlu0 0
  %224 = vperm.xlu0 %223, %v218
  %v225 = vpop.permute.xlu0 %224
  %228 = vset.pattern.permute.xlu0 0
  %229 = vperm.xlu0 %228, %v219
  %v230 = vpop.permute.xlu0 %229
  %233 = vset.pattern.permute.xlu0 0
  %234 = vperm.xlu0 %233, %v220
  %v235 = vpop.permute.xlu0 %234
  %238 = vset.pattern.permute.xlu0 0
  %239 = vperm.xlu0 %238, %v221
  %v240 = vpop.permute.xlu0 %239
  %v246 = vunpack.c.l.b16 %v210
  %v247 = vunpack.c.l.b16 %v211
  %v248 = vunpack.c.l.b16 %v212
  %v249 = vunpack.c.l.b16 %v213
  %v250 = vpack.c.b16 %v247, %v246
  %v251 = vpack.c.b16 %v249, %v248
  %vm252 = vcmask 523264
  %v254 = vsel %vm252, %v250, 0
  %v257 = vsel %vm252, %v251, 0
  %259 = vmatpush.bf16.msra.mxu0 0
  %260 = vmatpush.bf16.msra.mxu0 0
  %261 = vmatpush.bf16.msra.mxu0 0
  %262 = vmatpush.bf16.msra.mxu0 0
  %263 = vmatpush.bf16.msra.mxu0 %v217
  %264 = vmatpush.bf16.msra.mxu0 %v216
  %265 = vmatpush.bf16.msra.mxu0 %v215
  %266 = vmatpush.bf16.msra.mxu0 %v214
  %267 = vmatmul.bf16.gmra.mxu0 %v254
  %v268 = vpop.f32.mrf.mxu0
  %v269 = vadd.f32 %v225, %v268
  %v270 = vpop.f32.mrf.mxu0
  %v271 = vadd.f32 %v230, %v270
  %272 = vmatmul.bf16.gmra.mxu0 %v257
  %v273 = vpop.f32.mrf.mxu0
  %v274 = vadd.f32 %v235, %v273
  %v275 = vpop.f32.mrf.mxu0
  %v276 = vadd.f32 %v240, %v275
  %277 = vdwg.mxu0
  %v278 = vmax.f32 %v269, 0.0
  %v279 = vmax.f32 %v271, 0.0
  %v280 = vmax.f32 %v274, 0.0
  %v281 = vmax.f32 %v276, 0.0
  %v282 = vld [vmem:[%s5] sm:$0xf]
  %v283 = vld [vmem:[%s5 + $0x4] sm:$0xf]
  %v284 = vpack.c.bf16 %v279, %v278
  %v285 = vpack.c.bf16 %v281, %v280
  %v286 = vld [vmem:[%s6] sm:$0xff]
  %v287 = vld [vmem:[%s6 + $0x8] sm:$0x7f]
  %289 = vset.pattern.permute.xlu0 0
  %290 = vperm.xlu0 %289, %v286
  %v291 = vpop.permute.xlu0 %290
  %294 = vset.pattern.permute.xlu0 0
  %295 = vperm.xlu0 %294, %v287
  %v296 = vpop.permute.xlu0 %295
  %v300 = vunpack.c.l.b16 %v282
  %v301 = vunpack.c.l.b16 %v283
  %v302 = vpack.c.b16 %v301, %v300
  %vm303 = vcmask 261120
  %v305 = vsel %vm303, %v302, 0
  %307 = vmatpush.bf16.msra.mxu0 0
  %308 = vmatpush.bf16.msra.mxu0 0
  %309 = vmatpush.bf16.msra.mxu0 0
  %310 = vmatpush.bf16.msra.mxu0 0
  %311 = vmatpush.bf16.msra.mxu0 0
  %312 = vmatpush.bf16.msra.mxu0 0
  %313 = vmatpush.bf16.msra.mxu0 %v285
  %314 = vmatpush.bf16.msra.mxu0 %v284
  %315 = vmatmul.bf16.gmra.mxu0 %v305
  %v316 = vpop.f32.mrf.mxu0
  %v317 = vadd.f32 %v291, %v316
  %v318 = vpop.f32.mrf.mxu0
  %v319 = vadd.f32 %v296, %v318
  %320 = vdwg.mxu0
  %321 = vxpose.xlu0.b32.start [1/16] %v317, 128
  %322 = vxpose.xlu0.b32.cont [2/16] %v319, 128
  %323 = vxpose.xlu0.b32.cont [3/16] 0.0, 128
  %324 = vxpose.xlu0.b32.cont [4/16] 0.0, 128
  %325 = vxpose.xlu0.b32.cont [5/16] 0.0, 128
  %326 = vxpose.xlu0.b32.cont [6/16] 0.0, 128
  %327 = vxpose.xlu0.b32.cont [7/16] 0.0, 128
  %328 = vxpose.xlu0.b32.cont [8/16] 0.0, 128
  %329 = vxpose.xlu0.b32.cont [9/16] 0.0, 128
  %330 = vxpose.xlu0.b32.cont [10/16] 0.0, 128
  %331 = vxpose.xlu0.b32.cont [11/16] 0.0, 128
  %332 = vxpose.xlu0.b32.cont [12/16] 0.0, 128
  %333 = vxpose.xlu0.b32.cont [13/16] 0.0, 128
  %334 = vxpose.xlu0.b32.cont [14/16] 0.0, 128
  %335 = vxpose.xlu0.b32.cont [15/16] 0.0, 128
  %336 = vxpose.xlu0.b32.end [16/16] 0.0, 128
  %v337 = vpop.trf.xlu0
  %v338 = vpop.trf.xlu0
  %v339 = vpop.trf.xlu0
  %v340 = vpop.trf.xlu0
  %v341 = vpop.trf.xlu0
  %v342 = vpop.trf.xlu0
  %v343 = vpop.trf.xlu0
  %v344 = vpop.trf.xlu0
  %v345 = vpop.trf.xlu0
  %v346 = vpop.trf.xlu0
  %v347 = vpop.trf.xlu0
  %v348 = vpop.trf.xlu0
  %v349 = vpop.trf.xlu0
  %v350 = vpop.trf.xlu0
  %v351 = vpop.trf.xlu0
  %v352 = vpop.trf.xlu0
  %vm353 = vcmask 121856
  %354 = vst.msk [vmem:[%s7] sm:$0xff] %vm353, %v337
  %355 = vst.msk [vmem:[%s7 + $0x8] sm:$0xff] %vm353, %v338
  %356 = vst.msk [vmem:[%s7 + $0x10] sm:$0xff] %vm353, %v339
  %357 = vst.msk [vmem:[%s7 + $0x18] sm:$0xff] %vm353, %v340
  %358 = vst.msk [vmem:[%s7 + $0x20] sm:$0xff] %vm353, %v341
  %359 = vst.msk [vmem:[%s7 + $0x28] sm:$0xff] %vm353, %v342
  %360 = vst.msk [vmem:[%s7 + $0x30] sm:$0xff] %vm353, %v343
  %361 = vst.msk [vmem:[%s7 + $0x38] sm:$0xff] %vm353, %v344
  %362 = vst.msk [vmem:[%s7 + $0x40] sm:$0xff] %vm353, %v345
  %363 = vst.msk [vmem:[%s7 + $0x48] sm:$0xff] %vm353, %v346
  %364 = vst.msk [vmem:[%s7 + $0x50] sm:$0xff] %vm353, %v347
  %365 = vst.msk [vmem:[%s7 + $0x58] sm:$0xff] %vm353, %v348
  %366 = vst.msk [vmem:[%s7 + $0x60] sm:$0xff] %vm353, %v349
  %367 = vst.msk [vmem:[%s7 + $0x68] sm:$0xff] %vm353, %v350
  %368 = vst.msk [vmem:[%s7 + $0x70] sm:$0xff] %vm353, %v351
  %369 = vst.msk [vmem:[%s7 + $0x78] sm:$0xff] %vm353, %v352
  // Predicated region
  $region30: #{tpu_custom_call.1} parent=0 // pred_check
    _
  $region31: #{tpu_custom_call.1} parent=0 // pred_check_branch
    %371 = sbr.rel (0) target = $region33
  $region32: #{tpu_custom_call.1} parent=0 // pred_region
    _
  $region33: #{tpu_custom_call.1} parent=0 // pred_fallthru
    _
  // Predicated region
  $region34: #{tpu_custom_call.1} parent=0 // pred_check
    _
  $region35: #{tpu_custom_call.1} parent=0 // pred_check_branch
    %373 = sbr.rel (0) target = $region37
  $region36: #{tpu_custom_call.1} parent=0 // pred_region
    _
  $region37: #{tpu_custom_call.1} parent=0 // pred_fallthru
    _

</llo_original>
